<compile_context>
chip_gen: v5e
topology: v5e:2x2
jax: 0.10.0
libtpu: 0.0.40
codegen_flags: <defaults>
</compile_context>

<pallas_src>
import functools
import math

import jax
import jax.numpy as jnp
from jax.experimental import pallas as pl
from jax.experimental.pallas import tpu as pltpu

LANE = 128


def _round_up(x, m):
    return (x + m - 1) // m * m


@functools.lru_cache(maxsize=None)
def _budget():
    """Generation-aware VMEM / tile budgets (v7x has only 64 MiB VMEM)."""
    vmem = 128 << 20
    try:
        info = pltpu.get_tpu_info()
        vmem = int(getattr(info, "vmem_capacity_bytes", vmem))
    except Exception:
        pass
    small = vmem < (100 << 20)          # v7x-class core
    return dict(
        vmem_limit=(28 << 20) if small else (64 << 20),
        conv_tile=1024 if small else 2048,
        attn_tq=512 if small else 1024,
        attn_tk=512,
    )


def _pick_tile(tpad, target):
    """Largest multiple of 128 that divides tpad and is <= target."""
    best, t, cap = LANE, LANE, min(target, tpad)
    while t <= cap:
        if tpad % t == 0:
            best = t
        t += LANE
    return best


# ----------------------------------------------------------------------------
# Fused dilated conv kernel (bias, FiLM, activations, residual, masking)
# ----------------------------------------------------------------------------
def _conv_kernel(*refs, n_groups, K, dil, halo_l, halo_r, tile, out_valid,
                 pre_act, post_act, has_film, has_res, phase):
    """One (sample, time-tile) grid point.

    refs layout: for each input group: x_cur [, x_left halo, x_right halo];
    then w (rows, K*cin_tot), b (rows, 1), [film (2*rows, 1)], [res (rows, tile)],
    out (rows, tile).
    """
    idx = 0
    groups = []
    for _ in range(n_groups):
        cur = refs[idx]; idx += 1
        left = right = None
        if halo_l > 0:
            left = refs[idx]; idx += 1
        if halo_r > 0:
            right = refs[idx]; idx += 1
        groups.append((cur, left, right))
    w_ref = refs[idx]; idx += 1
    b_ref = refs[idx]; idx += 1
    film_ref = None
    if has_film:
        film_ref = refs[idx]; idx += 1
    res_ref = None
    if has_res:
        res_ref = refs[idx]; idx += 1
    o_ref = refs[idx]

    # program ids read at top level only (interpret-mode safe).
    j = pl.program_id(1)
    first = j == 0
    last = j == pl.num_programs(1) - 1

    # Build the halo-extended window per group; boundary halos are zeroed (the left
    # edge models the conv zero-padding, the right edge relies on the zero tail).
    wins = []
    for cur, left, right in groups:
        parts = []
        if left is not None:
            lh = left[:, LANE - halo_l:]
            parts.append(jnp.where(first, jnp.zeros_like(lh), lh))
        parts.append(cur[...])
        if right is not None:
            rh = right[:, :halo_r]
            parts.append(jnp.where(last, jnp.zeros_like(rh), rh))
        wins.append(jnp.concatenate(parts, axis=-1) if len(parts) > 1 else parts[0])
    xw = jnp.concatenate(wins, axis=0) if n_groups > 1 else wins[0]

    if pre_act == "lrelu":                       # elementwise in f32 (v5e-safe)
        xf = xw.astype(jnp.float32)
        xw = jnp.where(xf > 0, xf, 0.1 * xf).astype(xw.dtype)

    cin = xw.shape[0]
    rows = o_ref.shape[0]

    # K accumulating per-tap MXU dots (no im2col concatenate).
    acc = jnp.zeros((rows, tile), jnp.float32)
    for k in range(K):
        acc = acc + jnp.dot(w_ref[:, k * cin:(k + 1) * cin],
                            xw[:, k * dil:k * dil + tile],
                            preferred_element_type=jnp.float32)
    acc = acc + b_ref[...]

    if has_film:
        f = film_ref[...]                        # (2*rows, 1): [scale; shift]
        acc = acc * (1.0 + f[:rows]) + f[rows:]

    if post_act == "lrelu":
        acc = jnp.where(acc > 0, acc, 0.1 * acc)
    elif post_act == "tanh":
        acc = jnp.tanh(acc)

    if has_res:
        acc = acc + res_ref[...].astype(jnp.float32)

    # Zero-tail invariant (dense, unmasked 128-multiple store stays valid).
    col = j * tile + jax.lax.broadcasted_iota(jnp.int32, acc.shape, 1)
    if phase is None:
        acc = jnp.where(col < out_valid, acc, 0.0)
    else:
        s_up, cout_ph, n_total = phase           # polyphase rows are phase-major
        row_ph = jax.lax.broadcasted_iota(jnp.int32, acc.shape, 0) // cout_ph
        acc = jnp.where(col * s_up + row_ph < n_total, acc, 0.0)
    o_ref[...] = acc.astype(o_ref.dtype)


def fused_conv1d(xs, valid, w, b, *, dilation=1, padding=0,
                 w_lead=None, n_out_lead=None,
                 pre_act="none", post_act="none",
                 film=None, film_lead=None, residual=None,
                 phase=None, out_dtype=jnp.bfloat16, tile_override=None):
    """'Same'-style dilated Conv1d on lane-padded NCT activations, time-tiled.

    xs: list of (array (N, Cg, Tpad), lead_fn) -- all groups are concatenated along
        channels inside the kernel (used by the band merge).  Inputs must obey the
        zero-tail invariant (zeros beyond `valid`).
    Returns (y, out_valid) with y lane-padded and zero beyond out_valid.
    """
    tpad = xs[0][0].shape[-1]
    cin_tot = sum(a.shape[1] for a, _ in xs)
    G, rows, KC = w.shape
    assert KC % cin_tot == 0
    K = KC // cin_tot
    span = (K - 1) * dilation
    halo_l = padding
    halo_r = span - padding
    assert 0 <= halo_l <= LANE and 0 <= halo_r <= LANE, "halo must fit one 128-block"
    out_valid = valid + 2 * padding - span
    assert out_valid <= tpad, "output reuses the input's padded time width"
    n_lead = n_out_lead if n_out_lead is not None else xs[0][0].shape[0]

    cfg = _budget()
    tile = tile_override if tile_override is not None else _pick_tile(tpad, cfg["conv_tile"])
    assert tpad % tile == 0
    nT = tpad // tile
    blk = tile // LANE
    last128 = tpad // LANE - 1

    in_specs, args = [], []
    for a, lead in xs:
        cg = a.shape[1]
        in_specs.append(pl.BlockSpec((None, cg, tile),
                                     lambda i, j, lead=lead: (lead(i), 0, j)))
        args.append(a)
        if halo_l > 0:
            in_specs.append(pl.BlockSpec(
                (None, cg, LANE),
                lambda i, j, lead=lead: (lead(i), 0, jnp.maximum(j * blk - 1, 0))))
            args.append(a)
        if halo_r > 0:
            in_specs.append(pl.BlockSpec(
                (None, cg, LANE),
                lambda i, j, lead=lead: (lead(i), 0, jnp.minimum((j + 1) * blk, last128))))
            args.append(a)
    wl = w_lead if w_lead is not None else (lambda i: 0)
    in_specs.append(pl.BlockSpec((None, rows, KC), lambda i, j, wl=wl: (wl(i), 0, 0)))
    args.append(w)
    in_specs.append(pl.BlockSpec((None, rows, 1), lambda i, j, wl=wl: (wl(i), 0, 0)))
    args.append(b)
    has_film = film is not None
    if has_film:
        fl = film_lead if film_lead is not None else (lambda i: i)
        in_specs.append(pl.BlockSpec((None, 2 * rows, 1),
                                     lambda i, j, fl=fl: (fl(i), 0, 0)))
        args.append(film)
    has_res = residual is not None
    if has_res:
        in_specs.append(pl.BlockSpec((None, rows, tile), lambda i, j: (i, 0, j)))
        args.append(residual)

    kernel = functools.partial(
        _conv_kernel, n_groups=len(xs), K=K, dil=dilation,
        halo_l=halo_l, halo_r=halo_r, tile=tile, out_valid=out_valid,
        pre_act=pre_act, post_act=post_act, has_film=has_film, has_res=has_res,
        phase=phase)

    out_bytes = n_lead * rows * tpad * jnp.dtype(out_dtype).itemsize
    cost = pl.CostEstimate(
        flops=int(2 * n_lead * rows * KC * tpad),
        transcendentals=int(n_lead * rows * tpad) if post_act == "tanh" else 0,
        bytes_accessed=int(sum(int(a.size) * a.dtype.itemsize for a in args) + out_bytes),
    )
    y = pl.pallas_call(
        kernel,
        out_shape=jax.ShapeDtypeStruct((n_lead, rows, tpad), out_dtype),
        grid=(n_lead, nT),
        in_specs=in_specs,
        out_specs=pl.BlockSpec((None, rows, tile), lambda i, j: (i, 0, j)),
        compiler_params=pltpu.CompilerParams(
            dimension_semantics=("parallel", "parallel"),
            vmem_limit_bytes=cfg["vmem_limit"]),
        cost_estimate=cost,
    )(*args)
    return y, out_valid


# ----------------------------------------------------------------------------
# ConvTranspose1d via polyphase decomposition
# ----------------------------------------------------------------------------
def pallas_conv_transpose1d(x, valid, w_poly, b_poly, *, stride, cout):
    """ConvTranspose1d(kernel=2*stride, padding=stride//2), polyphase form.

    One (stride*Cout, 3*Cin) x (3*Cin, tile) contraction over the un-upsampled input
    (no zero insertion).  Phase columns are masked in-kernel so the interleaved
    result keeps the zero-tail invariant without extra XLA slice/pad passes.
    """
    NB, _, tpad = x.shape
    s = stride
    pad = s // 2
    n_out = (valid - 1) * s - 2 * pad + 2 * s
    # TODO(synk): odd strides lose one tail sample when valid == tpad (not hit here).
    y, _ = fused_conv1d([(x, lambda i: i)], valid, w_poly, b_poly,
                        dilation=1, padding=1, phase=(s, cout, n_out))
    y = y.reshape(NB, s, cout, tpad).transpose(0, 2, 3, 1).reshape(NB, cout, tpad * s)
    return y, n_out


# ----------------------------------------------------------------------------
# Small dense layers (conditioning path)
# ----------------------------------------------------------------------------
def _linear_kernel(x_ref, w_ref, b_ref, o_ref, *, act):
    y = jnp.dot(x_ref[...], w_ref[...], preferred_element_type=jnp.float32) + b_ref[...]
    if act == "silu":
        y = y * jax.nn.sigmoid(y)
    o_ref[...] = y.astype(o_ref.dtype)


def pallas_linear(x, w, b, activation="none"):
    lead = x.shape[:-1]
    fin = x.shape[-1]
    fout = w.shape[0]
    M = int(math.prod(lead)) if lead else 1
    Mp = _round_up(max(M, 1), 8)
    Fp = _round_up(fout, LANE)
    x2 = x.reshape(M, fin)
    if Mp > M:
        x2 = jnp.pad(x2, ((0, Mp - M), (0, 0)))
    wt = jnp.pad(w.T, ((0, 0), (0, Fp - fout))) if Fp > fout else w.T
    b2 = (jnp.pad(b, (0, Fp - fout)) if Fp > fout else b).reshape(1, Fp)
    out = pl.pallas_call(
        functools.partial(_linear_kernel, act=activation),
        out_shape=jax.ShapeDtypeStruct((Mp, Fp), jnp.float32),
        grid=(1,),
        in_specs=[pl.BlockSpec((Mp, fin), lambda i: (0, 0)),
                  pl.BlockSpec((fin, Fp), lambda i: (0, 0)),
                  pl.BlockSpec((1, Fp), lambda i: (0, 0))],
        out_specs=pl.BlockSpec((Mp, Fp), lambda i: (0, 0)),
    )(x2, wt, b2)
    return out[:M, :fout].reshape(*lead, fout)


# ----------------------------------------------------------------------------
# Flash-style self-attention over time
# ----------------------------------------------------------------------------
def _flash_attn_kernel(q_ref, k_ref, v_ref, o_ref, m_sc, l_sc, acc_sc, *, valid):
    qi = pl.program_id(1)           # read at top level (never inside pl.when)
    ki = pl.program_id(2)
    last_k = pl.num_programs(2) - 1
    TQ = o_ref.shape[-1]
    TK = k_ref.shape[-1]

    @pl.when(ki == 0)
    def _():
        m_sc[...] = jnp.full_like(m_sc, -1e30)
        l_sc[...] = jnp.zeros_like(l_sc)
        acc_sc[...] = jnp.zeros_like(acc_sc)

    q = q_ref[...]                  # 1/sqrt(C) already folded into the q projection
    k = k_ref[...]
    v = v_ref[...]

    # scores (TK, TQ): contract on channels, no explicit transposes.
    s = jax.lax.dot_general(k, q, (((0,), (0,)), ((), ())),
                            preferred_element_type=jnp.float32)
    key_idx = ki * TK + jax.lax.broadcasted_iota(jnp.int32, s.shape, 0)
    kmask = key_idx < valid
    s = jnp.where(kmask, s, -1e30)

    m_prev = m_sc[...]
    m_new = jnp.maximum(m_prev, jnp.max(s, axis=0, keepdims=True))      # (1, TQ)
    alpha = jnp.exp(m_prev - m_new)
    p = jnp.where(kmask, jnp.exp(s - m_new), 0.0)                       # hard-mask pads
    l_sc[...] = alpha * l_sc[...] + jnp.sum(p, axis=0, keepdims=True)
    acc_sc[...] = alpha * acc_sc[...] + jnp.dot(v, p.astype(v.dtype),
                                                preferred_element_type=jnp.float32)
    m_sc[...] = m_new

    q_col = qi * TQ + jax.lax.broadcasted_iota(jnp.int32, acc_sc.shape, 1)

    @pl.when(ki == last_k)
    def _():
        out = acc_sc[...] / jnp.maximum(l_sc[...], 1e-30)
        out = jnp.where(q_col < valid, out, 0.0)    # keep the zero-tail invariant
        o_ref[...] = out.astype(o_ref.dtype)


def pallas_flash_attention(qkv, valid, C):
    """Online-softmax attention; q/k/v are channel blocks of one fused array."""
    NB, _, tpad = qkv.shape
    cfg = _budget()
    TQ = _pick_tile(tpad, cfg["attn_tq"])
    TK = _pick_tile(tpad, cfg["attn_tk"])
    cost = pl.CostEstimate(
        flops=int(4 * NB * tpad * tpad * C),
        transcendentals=int(NB * tpad * tpad),
        bytes_accessed=int(qkv.size * qkv.dtype.itemsize + NB * C * tpad * 2),
    )
    return pl.pallas_call(
        functools.partial(_flash_attn_kernel, valid=valid),
        out_shape=jax.ShapeDtypeStruct((NB, C, tpad), jnp.bfloat16),
        grid=(NB, tpad // TQ, tpad // TK),
        in_specs=[
            pl.BlockSpec((None, C, TQ), lambda b, qi, ki: (b, 0, qi)),   # q channels
            pl.BlockSpec((None, C, TK), lambda b, qi, ki: (b, 1, ki)),   # k channels
            pl.BlockSpec((None, C, TK), lambda b, qi, ki: (b, 2, ki)),   # v channels
        ],
        out_specs=pl.BlockSpec((None, C, TQ), lambda b, qi, ki: (b, 0, qi)),
        scratch_shapes=[pltpu.VMEM((1, TQ), jnp.float32),
                        pltpu.VMEM((1, TQ), jnp.float32),
                        pltpu.VMEM((C, TQ), jnp.float32)],
        compiler_params=pltpu.CompilerParams(
            dimension_semantics=("parallel", "parallel", "arbitrary"),
            vmem_limit_bytes=cfg["vmem_limit"]),
        cost_estimate=cost,
    )(qkv, qkv, qkv)


# ----------------------------------------------------------------------------
# Parameter init (deterministic, synthetic; PyTorch-style layouts)
# ----------------------------------------------------------------------------
def _conv_init(key, cin, cout, k, scale=0.1):
    kw, kb = jax.random.split(key)
    return {"w": jax.random.normal(kw, (cout, cin, k), jnp.float32) * scale,
            "b": jax.random.normal(kb, (cout,), jnp.float32) * scale}


def _linear_init(key, fin, fout, scale=0.1):
    kw, kb = jax.random.split(key)
    return {"w": jax.random.normal(kw, (fout, fin), jnp.float32) * scale,
            "b": jax.random.normal(kb, (fout,), jnp.float32) * scale}


def init_params(key, cfg):
    keys = iter(jax.random.split(key, 256))
    p = {}
    band_size = cfg["channels"] // cfg["num_bands"]
    p["band_split"] = [_conv_init(next(keys), band_size, cfg["hidden_dim"], 7)
                       for _ in range(cfg["num_bands"])]
    p["cond_prosody"] = [_linear_init(next(keys), 18, cfg["cond_dim"] // 2),
                         _linear_init(next(keys), cfg["cond_dim"] // 2, cfg["cond_dim"])]
    p["style_proj"] = _linear_init(next(keys), cfg["style_dim"], cfg["cond_dim"])
    p["emotion_proj"] = _linear_init(next(keys), 6, cfg["cond_dim"])
    p["upsample_blocks"] = []
    ch = cfg["hidden_dim"]
    for i, factor in enumerate(cfg["upsample_factors"]):
        blk = {}
        kw, kb = jax.random.split(next(keys))
        # ConvTranspose1d weight layout: (in_ch, out_ch, K)
        blk["up"] = {"w": jax.random.normal(kw, (ch, ch // 2, factor * 2), jnp.float32) * 0.1,
                     "b": jax.random.normal(kb, (ch // 2,), jnp.float32) * 0.1}
        blk["res"] = []
        for _d in cfg["res_dilations"]:
            blk["res"].append({
                "conv1": _conv_init(next(keys), ch // 2, ch // 2, 3),
                "conv2": _conv_init(next(keys), ch // 2, ch // 2, 3),
                "film": _linear_init(next(keys), cfg["cond_dim"], 2 * (ch // 2)),
            })
        if i == len(cfg["upsample_factors"]) // 2:
            blk["attn"] = {n: _conv_init(next(keys), ch // 2, ch // 2, 1)
                           for n in ("q", "k", "v", "o")}
        p["upsample_blocks"].append(blk)
        ch //= 2
    p["band_merge"] = _conv_init(next(keys), ch * cfg["num_bands"], 1, 7)
    return p


# ----------------------------------------------------------------------------
# Kernel-ready parameter preparation
# ----------------------------------------------------------------------------
def _flat_conv_w(w):
    """(Cout, Cin, K) -> (Cout, K*Cin) matching the kernel's tap-major layout."""
    co, ci, k = w.shape
    return jnp.transpose(w, (0, 2, 1)).reshape(co, k * ci)


def _polyphase_weight(w, b, stride):
    """ConvTranspose1d weight (Cin, Cout, 2*stride) -> polyphase (stride*Cout, 3*Cin)."""
    cin, cout, K = w.shape
    s = stride
    assert K == 2 * s, "expected kernel_size == 2 * stride"
    pad = s // 2
    wf = jnp.transpose(w[:, :, ::-1], (1, 0, 2))      # wf[co, ci, k] = w[ci, co, K-1-k]
    rows = []
    for r in range(s):
        m = 2 * s - 1 - pad - r
        k0, d = m % s, -(m // s)                      # d in {-1, 0}
        wr = jnp.zeros((cout, 3, cin), w.dtype)
        wr = wr.at[:, d + 1, :].set(wf[:, :, k0])
        wr = wr.at[:, d + 2, :].set(wf[:, :, k0 + s])
        rows.append(wr.reshape(cout, 3 * cin))
    return jnp.concatenate(rows, axis=0), jnp.tile(b, s)


def prepare_params(params, cfg):
    kp = {}
    kp["cond0_w"], kp["cond0_b"] = params["cond_prosody"][0]["w"], params["cond_prosody"][0]["b"]
    kp["cond1_w"], kp["cond1_b"] = params["cond_prosody"][1]["w"], params["cond_prosody"][1]["b"]
    kp["style_w"], kp["style_b"] = params["style_proj"]["w"], params["style_proj"]["b"]
    kp["emo_w"], kp["emo_b"] = params["emotion_proj"]["w"], params["emotion_proj"]["b"]

    band_size = cfg["channels"] // cfg["num_bands"]
    band_cin = _round_up(band_size, 8)                 # keep sublane dim >= 8

    def _pad_cin(w):
        return jnp.pad(w, ((0, 0), (0, band_cin - band_size), (0, 0)))

    kp["band_cin"] = band_cin
    kp["band_split_w"] = jnp.stack(
        [_flat_conv_w(_pad_cin(p["w"])) for p in params["band_split"]]).astype(jnp.bfloat16)
    kp["band_split_b"] = jnp.stack(
        [p["b"].reshape(-1, 1) for p in params["band_split"]]).astype(jnp.float32)

    film_ws, film_bs, blocks = [], [], []
    off = 0
    ch = cfg["hidden_dim"]
    for bi, factor in enumerate(cfg["upsample_factors"]):
        bp = params["upsample_blocks"][bi]
        out_ch = ch // 2
        w_poly, b_poly = _polyphase_weight(bp["up"]["w"], bp["up"]["b"], factor)
        blk = {"up_w": w_poly[None].astype(jnp.bfloat16),
               "up_b": b_poly[None, :, None].astype(jnp.float32),
               "up_cout": out_ch, "res": []}
        for rj, dil in enumerate(cfg["res_dilations"]):
            rp = bp["res"][rj]
            blk["res"].append({
                "w1": _flat_conv_w(rp["conv1"]["w"])[None].astype(jnp.bfloat16),
                "b1": rp["conv1"]["b"][None, :, None].astype(jnp.float32),
                "w2": _flat_conv_w(rp["conv2"]["w"])[None].astype(jnp.bfloat16),
                "b2": rp["conv2"]["b"][None, :, None].astype(jnp.float32),
                "dil": dil, "ch": out_ch, "film_off": off,
            })
            film_ws.append(rp["film"]["w"])
            film_bs.append(rp["film"]["b"])
            off += 2 * out_ch
        if "attn" in bp:
            ap = bp["attn"]
            scale = 1.0 / math.sqrt(out_ch)            # fold 1/sqrt(C) into q projection
            qkv_w = jnp.concatenate([ap["q"]["w"] * scale, ap["k"]["w"], ap["v"]["w"]], axis=0)
            qkv_b = jnp.concatenate([ap["q"]["b"] * scale, ap["k"]["b"], ap["v"]["b"]], axis=0)
            blk["attn"] = {
                "qkv_w": _flat_conv_w(qkv_w)[None].astype(jnp.bfloat16),
                "qkv_b": qkv_b[None, :, None].astype(jnp.float32),
                "o_w": _flat_conv_w(ap["o"]["w"])[None].astype(jnp.bfloat16),
                "o_b": ap["o"]["b"][None, :, None].astype(jnp.float32),
            }
        blocks.append(blk)
        ch //= 2
    kp["blocks"] = blocks
    kp["film_w"] = jnp.concatenate(film_ws, axis=0)
    kp["film_b"] = jnp.concatenate(film_bs, axis=0)
    kp["merge_w"] = _flat_conv_w(params["band_merge"]["w"])[None].astype(jnp.bfloat16)
    kp["merge_b"] = params["band_merge"]["b"].reshape(1, 1, 1).astype(jnp.float32)
    return kp


# ----------------------------------------------------------------------------
# Forward pass (matches the PyTorch Generator.forward semantics)
# ----------------------------------------------------------------------------
def _residual_block(rb, x, valid, film, B):
    # conv1 fuses: pre leaky-ReLU, dilated conv, bias, FiLM, post leaky-ReLU.
    h, _ = fused_conv1d([(x, lambda i: i)], valid, rb["w1"], rb["b1"],
                        dilation=rb["dil"], padding=rb["dil"],
                        pre_act="lrelu", post_act="lrelu",
                        film=film, film_lead=lambda i: i % B)
    # conv2 fuses: conv, bias, residual add.
    y, _ = fused_conv1d([(h, lambda i: i)], valid, rb["w2"], rb["b2"],
                        dilation=1, padding=1, residual=x)
    return y


def _self_attention(ap, x, valid):
    C = x.shape[1]
    qkv, _ = fused_conv1d([(x, lambda i: i)], valid, ap["qkv_w"], ap["qkv_b"], padding=0)
    a = pallas_flash_attention(qkv, valid, C)
    y, _ = fused_conv1d([(a, lambda i: i)], valid, ap["o_w"], ap["o_b"],
                        padding=0, residual=x)
    return y


def generator_forward(kp, cfg, mel, prosody, style, emotion,
                      style_drop=False, emo_drop=False, w_style=1.0, w_emo=1.0):
    nb = cfg["num_bands"]
    B, C, T = mel.shape

    # --- conditioning (tiny, f32) --------------------------------------------
    h = pallas_linear(prosody, kp["cond0_w"], kp["cond0_b"], activation="silu")
    c_pros = pallas_linear(h, kp["cond1_w"], kp["cond1_b"])                  # (B, Tp, cond)
    c_sty = pallas_linear(style, kp["style_w"], kp["style_b"]) * w_style
    if style_drop:
        c_sty = jnp.zeros_like(c_sty)
    c_emo = pallas_linear(emotion, kp["emo_w"], kp["emo_b"]) * w_emo
    if emo_drop:
        c_emo = jnp.zeros_like(c_emo)
    # FiLM uses the time-pooled cond signal (ResidualBlock internals assumed); all
    # res-block FiLM projections are computed by one batched GEMM.
    g = jnp.mean(c_pros, axis=1) + c_sty + c_emo                             # (B, cond_dim)
    film_all = pallas_linear(g, kp["film_w"], kp["film_b"])                  # (B, total_film)

    # --- band split: bands folded into the batch axis -------------------------
    band_size = C // nb
    tpad = _round_up(T, LANE)
    x = mel.astype(jnp.bfloat16)
    if tpad > T:
        x = jnp.pad(x, ((0, 0), (0, 0), (0, tpad - T)))
    x = x.reshape(B, nb, band_size, tpad).transpose(1, 0, 2, 3).reshape(nb * B, band_size, tpad)
    if kp["band_cin"] > band_size:
        x = jnp.pad(x, ((0, 0), (0, kp["band_cin"] - band_size), (0, 0)))
    x, valid = fused_conv1d([(x, lambda i: i)], T, kp["band_split_w"], kp["band_split_b"],
                            padding=3, w_lead=lambda i: i // B)

    # --- upsampling stacks (one launch per op for all bands x batch) ----------
    for bi, blk in enumerate(kp["blocks"]):
        x, valid = pallas_conv_transpose1d(x, valid, blk["up_w"], blk["up_b"],
                                           stride=cfg["upsample_factors"][bi],
                                           cout=blk["up_cout"])
        for rb in blk["res"]:
            ch = rb["ch"]
            f = film_all[:, rb["film_off"]:rb["film_off"] + 2 * ch]
            f = f.reshape(B, 2 * ch, 1).astype(jnp.float32)       # packed scale+shift
            x = _residual_block(rb, x, valid, f, B)
        if "attn" in blk:
            x = _self_attention(blk["attn"], x, valid)

    # --- band merge + tanh: reads the band-folded activation directly ---------
    wav, out_valid = fused_conv1d(
        [(x, (lambda i, gg=gg: gg * B + i)) for gg in range(nb)],
        valid, kp["merge_w"], kp["merge_b"], padding=3, post_act="tanh",
        out_dtype=jnp.float32, n_out_lead=B)
    return wav[:, :, :out_valid]


# ----------------------------------------------------------------------------
if __name__ == "__main__":
    cfg = dict(channels=8, num_bands=2, hidden_dim=32, cond_dim=16, style_dim=12,
               upsample_factors=(2, 2), res_dilations=(1, 3))

    key = jax.random.PRNGKey(0)
    kinit, km, kpr, ks, ke, kchk = jax.random.split(key, 6)
    params = init_params(kinit, cfg)
    kparams = prepare_params(params, cfg)

    # --- sanity check of the time-tiled halo conv path against lax.conv -------
    k1, k2, k3 = jax.random.split(kchk, 3)
    Bc, Ci, Co, Tc, Kc, dil = 2, 8, 16, 40, 3, 2
    xc = jax.random.normal(k1, (Bc, Ci, Tc), jnp.float32)
    wc = jax.random.normal(k2, (Co, Ci, Kc), jnp.float32) * 0.2
    bc = jax.random.normal(k3, (Co,), jnp.float32) * 0.2
    ref = jax.lax.conv_general_dilated(
        xc, wc, window_strides=(1,), padding=[(dil, dil)], rhs_dilation=(dil,),
        dimension_numbers=("NCH", "OIH", "NCH")) + bc[None, :, None]
    xp = jnp.pad(xc.astype(jnp.bfloat16), ((0, 0), (0, 0), (0, 256 - Tc)))
    got, ov = fused_conv1d([(xp, lambda i: i)], Tc,
                           _flat_conv_w(wc)[None].astype(jnp.bfloat16),
                           bc[None, :, None].astype(jnp.float32),
                           dilation=dil, padding=dil, tile_override=LANE)
    assert ov == Tc
    err = float(jnp.max(jnp.abs(got[:, :, :Tc].astype(jnp.float32) - ref)))
    assert err < 0.1, f"tiled conv mismatch: {err}"

    # --- full generator forward ------------------------------------------------
    B, T = 2, 16
    mel = jax.random.normal(km, (B, cfg["channels"], T), jnp.float32)
    prosody = jax.random.normal(kpr, (B, T, 18), jnp.float32)
    style = jax.random.normal(ks, (B, cfg["style_dim"]), jnp.float32)
    emotion = jax.random.normal(ke, (B, 6), jnp.float32)

    fwd = jax.jit(lambda m, p, s, e: generator_forward(kparams, cfg, m, p, s, e))
    wav = fwd(mel, prosody, style, emotion)
    jax.block_until_ready(wav)

    up_total = math.prod(cfg["upsample_factors"])
    assert wav.shape == (B, 1, T * up_total), wav.shape
    assert bool(jnp.all(jnp.isfinite(wav)))
    print("KERNEL_OK")
</pallas_src>

<mosaic_0001>
module attributes {stable_mosaic.version = 11 : i64} {
  func.func @_conv_kernel(%arg0: i32, %arg1: i32, %arg2: memref<1x8x128xbf16, #tpu.memory_space<vmem>>, %arg3: memref<1x8x128xbf16, #tpu.memory_space<vmem>>, %arg4: memref<1x8x128xbf16, #tpu.memory_space<vmem>>, %arg5: memref<1x16x24xbf16, #tpu.memory_space<vmem>>, %arg6: memref<1x16x1xf32, #tpu.memory_space<vmem>>, %arg7: memref<1x16x128xbf16, #tpu.memory_space<vmem>>) attributes {dimension_semantics = [#tpu.dimension_semantics<parallel>, #tpu.dimension_semantics<parallel>], iteration_bounds = array<i64: 2, 2>, scalar_prefetch = 0 : i64, scratch_operands = 0 : i64, tpu.core_type = #tpu.core_type<tc>, window_params = [{transform_indices = @transform_0, window_bounds = array<i64: 1, 8, 128>}, {transform_indices = @transform_1, window_bounds = array<i64: 1, 8, 128>}, {transform_indices = @transform_2, window_bounds = array<i64: 1, 8, 128>}, {pipeline_mode = #tpu.pipeline_mode<synchronous>, transform_indices = @transform_3, window_bounds = array<i64: 1, 16, 24>}, {pipeline_mode = #tpu.pipeline_mode<synchronous>, transform_indices = @transform_4, window_bounds = array<i64: 1, 16, 1>}, {transform_indices = @transform_5, window_bounds = array<i64: 1, 16, 128>}]} {
    %c0_i32 = arith.constant 0 : i32
    %0 = arith.cmpi eq, %arg1, %c0_i32 : i32
    %c1_i32 = arith.constant 1 : i32
    %1 = arith.cmpi eq, %arg1, %c1_i32 : i32
    %c0 = arith.constant 0 : index
    %c0_0 = arith.constant 0 : index
    %c126 = arith.constant 126 : index
    %2 = vector.load %arg3[%c0, %c0_0, %c126] : memref<1x8x128xbf16, #tpu.memory_space<vmem>>, vector<1x8x2xbf16>
    %3 = vector.shape_cast %2 : vector<1x8x2xbf16> to vector<8x2xbf16>
    %cst = arith.constant 0.000000e+00 : bf16
    %4 = vector.broadcast %cst : bf16 to vector<8x2xbf16>
    %5 = arith.select %0, %4, %3 : vector<8x2xbf16>
    %c0_1 = arith.constant 0 : index
    %c0_2 = arith.constant 0 : index
    %c0_3 = arith.constant 0 : index
    %6 = vector.load %arg2[%c0_1, %c0_2, %c0_3] : memref<1x8x128xbf16, #tpu.memory_space<vmem>>, vector<1x8x128xbf16>
    %7 = vector.shape_cast %6 : vector<1x8x128xbf16> to vector<8x128xbf16>
    %c0_4 = arith.constant 0 : index
    %c0_5 = arith.constant 0 : index
    %c0_6 = arith.constant 0 : index
    %8 = vector.load %arg4[%c0_4, %c0_5, %c0_6] : memref<1x8x128xbf16, #tpu.memory_space<vmem>>, vector<1x8x2xbf16>
    %9 = vector.shape_cast %8 : vector<1x8x2xbf16> to vector<8x2xbf16>
    %cst_7 = arith.constant 0.000000e+00 : bf16
    %10 = vector.broadcast %cst_7 : bf16 to vector<8x2xbf16>
    %11 = arith.select %1, %10, %9 : vector<8x2xbf16>
    %12 = tpu.concatenate %5, %7, %11 in 1 : vector<8x2xbf16>, vector<8x128xbf16>, vector<8x2xbf16> -> vector<8x132xbf16>
    %cst_8 = arith.constant 0.000000e+00 : f32
    %13 = vector.broadcast %cst_8 : f32 to vector<16x128xf32>
    %c0_9 = arith.constant 0 : index
    %c0_10 = arith.constant 0 : index
    %c0_11 = arith.constant 0 : index
    %14 = vector.load %arg5[%c0_9, %c0_10, %c0_11] : memref<1x16x24xbf16, #tpu.memory_space<vmem>>, vector<1x16x8xbf16>
    %15 = vector.shape_cast %14 : vector<1x16x8xbf16> to vector<16x8xbf16>
    %16 = vector.extract_strided_slice %12 {offsets = [0, 0], sizes = [8, 128], strides = [1, 1]} : vector<8x132xbf16> to vector<8x128xbf16>
    %cst_12 = arith.constant dense<0.000000e+00> : vector<16x128xf32>
    %17 = tpu.matmul %15, %16, %cst_12 {dimension_numbers = #tpu.dot_dimension_numbers<[1], [0], [0], [1], [0, 0, 1, 1], [], []>} : vector<16x8xbf16>, vector<8x128xbf16>, vector<16x128xf32> -> vector<16x128xf32>
    %18 = arith.addf %13, %17 : vector<16x128xf32>
    %c0_13 = arith.constant 0 : index
    %c0_14 = arith.constant 0 : index
    %c8 = arith.constant 8 : index
    %19 = vector.load %arg5[%c0_13, %c0_14, %c8] : memref<1x16x24xbf16, #tpu.memory_space<vmem>>, vector<1x16x8xbf16>
    %20 = vector.shape_cast %19 : vector<1x16x8xbf16> to vector<16x8xbf16>
    %21 = vector.extract_strided_slice %12 {offsets = [0, 2], sizes = [8, 128], strides = [1, 1]} : vector<8x132xbf16> to vector<8x128xbf16>
    %cst_15 = arith.constant dense<0.000000e+00> : vector<16x128xf32>
    %22 = tpu.matmul %20, %21, %cst_15 {dimension_numbers = #tpu.dot_dimension_numbers<[1], [0], [0], [1], [0, 0, 1, 1], [], []>} : vector<16x8xbf16>, vector<8x128xbf16>, vector<16x128xf32> -> vector<16x128xf32>
    %23 = arith.addf %18, %22 : vector<16x128xf32>
    %c0_16 = arith.constant 0 : index
    %c0_17 = arith.constant 0 : index
    %c16 = arith.constant 16 : index
    %24 = vector.load %arg5[%c0_16, %c0_17, %c16] : memref<1x16x24xbf16, #tpu.memory_space<vmem>>, vector<1x16x8xbf16>
    %25 = vector.shape_cast %24 : vector<1x16x8xbf16> to vector<16x8xbf16>
    %26 = vector.extract_strided_slice %12 {offsets = [0, 4], sizes = [8, 128], strides = [1, 1]} : vector<8x132xbf16> to vector<8x128xbf16>
    %cst_18 = arith.constant dense<0.000000e+00> : vector<16x128xf32>
    %27 = tpu.matmul %25, %26, %cst_18 {dimension_numbers = #tpu.dot_dimension_numbers<[1], [0], [0], [1], [0, 0, 1, 1], [], []>} : vector<16x8xbf16>, vector<8x128xbf16>, vector<16x128xf32> -> vector<16x128xf32>
    %28 = arith.addf %23, %27 : vector<16x128xf32>
    %c0_19 = arith.constant 0 : index
    %c0_20 = arith.constant 0 : index
    %c0_21 = arith.constant 0 : index
    %29 = vector.load %arg6[%c0_19, %c0_20, %c0_21] : memref<1x16x1xf32, #tpu.memory_space<vmem>>, vector<1x16x1xf32>
    %30 = vector.shape_cast %29 : vector<1x16x1xf32> to vector<16x1xf32>
    %31 = vector.broadcast %30 : vector<16x1xf32> to vector<16x128xf32>
    %32 = arith.addf %28, %31 : vector<16x128xf32>
    %c128_i32 = arith.constant 128 : i32
    %33 = arith.muli %arg1, %c128_i32 : i32
    %34 = tpu.iota {dimensions = array<i32: 1>} : vector<16x128xi32>
    %35 = vector.broadcast %33 : i32 to vector<16x128xi32>
    %36 = arith.addi %35, %34 : vector<16x128xi32>
    %c40_i32 = arith.constant 40 : i32
    %37 = vector.broadcast %c40_i32 : i32 to vector<16x128xi32>
    %38 = arith.cmpi slt, %36, %37 : vector<16x128xi32>
    %cst_22 = arith.constant 0.000000e+00 : f32
    %39 = vector.broadcast %cst_22 : f32 to vector<16x128xf32>
    %40 = arith.select %38, %32, %39 : vector<16x128xi1>, vector<16x128xf32>
    %41 = arith.truncf %40 : vector<16x128xf32> to vector<16x128xbf16>
    %c0_23 = arith.constant 0 : index
    %c0_24 = arith.constant 0 : index
    %c0_25 = arith.constant 0 : index
    %42 = vector.load %arg7[%c0_23, %c0_24, %c0_25] : memref<1x16x128xbf16, #tpu.memory_space<vmem>>, vector<1x16x128xbf16>
    %43 = vector.shape_cast %42 : vector<1x16x128xbf16> to vector<16x128xbf16>
    %44 = vector.shape_cast %41 : vector<16x128xbf16> to vector<1x16x128xbf16>
    tpu.vector_store %arg7[%c0_23, %c0_24, %c0_25], %44 {strides = array<i32>} : memref<1x16x128xbf16, #tpu.memory_space<vmem>>, vector<1x16x128xbf16>,
    return
  }
  func.func @transform_0(%arg0: i32, %arg1: i32) -> (i32, i32, i32) {
    %c0_i32 = arith.constant 0 : i32
    %c0_i32_0 = arith.constant 0 : i32
    return %arg0, %c0_i32, %arg1 : i32, i32, i32
  }
  func.func @transform_1(%arg0: i32, %arg1: i32) -> (i32, i32, i32) {
    %c1_i32 = arith.constant 1 : i32
    %0 = arith.muli %arg1, %c1_i32 : i32
    %c1_i32_0 = arith.constant 1 : i32
    %1 = arith.subi %0, %c1_i32_0 : i32
    %c0_i32 = arith.constant 0 : i32
    %2 = arith.maxsi %1, %c0_i32 : i32
    %c0_i32_1 = arith.constant 0 : i32
    %c0_i32_2 = arith.constant 0 : i32
    return %arg0, %c0_i32_1, %2 : i32, i32, i32
  }
  func.func @transform_2(%arg0: i32, %arg1: i32) -> (i32, i32, i32) {
    %c1_i32 = arith.constant 1 : i32
    %0 = arith.addi %arg1, %c1_i32 : i32
    %c1_i32_0 = arith.constant 1 : i32
    %1 = arith.muli %0, %c1_i32_0 : i32
    %c1_i32_1 = arith.constant 1 : i32
    %2 = arith.minsi %1, %c1_i32_1 : i32
    %c0_i32 = arith.constant 0 : i32
    %c0_i32_2 = arith.constant 0 : i32
    return %arg0, %c0_i32, %2 : i32, i32, i32
  }
  func.func @transform_3(%arg0: i32, %arg1: i32) -> (i32, i32, i32) {
    %c0_i32 = arith.constant 0 : i32
    %c0_i32_0 = arith.constant 0 : i32
    %c0_i32_1 = arith.constant 0 : i32
    %c0_i32_2 = arith.constant 0 : i32
    return %c0_i32, %c0_i32_0, %c0_i32_1 : i32, i32, i32
  }
  func.func @transform_4(%arg0: i32, %arg1: i32) -> (i32, i32, i32) {
    %c0_i32 = arith.constant 0 : i32
    %c0_i32_0 = arith.constant 0 : i32
    %c0_i32_1 = arith.constant 0 : i32
    %c0_i32_2 = arith.constant 0 : i32
    return %c0_i32, %c0_i32_0, %c0_i32_1 : i32, i32, i32
  }
  func.func @transform_5(%arg0: i32, %arg1: i32) -> (i32, i32, i32) {
    %c0_i32 = arith.constant 0 : i32
    %c0_i32_0 = arith.constant 0 : i32
    return %arg0, %c0_i32, %arg1 : i32, i32, i32
  }
}

</mosaic_0001>

<llo_original>
// kernel: tpu_custom_call.1
$region0: #{tpu_custom_call.1}
  #allocation0 [shape = 'u32[]', space=smem, size = 0x4, offset = 0x4, fixed_abs, tag = 'smem constant byte address 0x4 - core index']
  #allocation1 [shape = 'u32[72,128]{1,0:T(1,128)}', space=vmem, size = 0x9000, scoped, tag = 'internal scratch']
  %s0 = inlined_call_operand.vmem [shape: bf16[2,8,256], index: 0, kind: input, shape index: {}]
  %s1 = inlined_call_operand.hbm [shape: bf16[2,8,256], index: 1, kind: input, shape index: {}]
  %s2 = inlined_call_operand.hbm [shape: bf16[2,8,256], index: 2, kind: input, shape index: {}]
  %s3 = inlined_call_operand.hbm [shape: bf16[1,16,24], index: 3, kind: input, shape index: {}]
  %s4 = inlined_call_operand.vmem [shape: f32[1,16,1], index: 4, kind: input, shape index: {}]
  %s5 = inlined_call_operand.hbm [shape: bf16[2,16,256], index: 5, kind: output, shape index: {}]
  %s6 = sld [smem:[#allocation0]]
  $region65: #{tpu_custom_call.1} parent=0
    _
  %s8 = ssub.s32 1, %s6
  %s9 = scalar_select 0, %s8, %s6
  $region1: #{tpu_custom_call.1} parent=0
    #allocation2 [shape = 'u8[4096]{0}', space=vmem, size = 0x1000, scoped, tag = 'input window, operand 1']
    #allocation3 [shape = 's32[2]{0}', space=sflag, size = 0x8, scoped, tag = 'scoped memory for tpu_custom_call.1']
    #allocation4 [shape = 's32[2]{0}', space=sflag, size = 0x8, scoped, tag = 'scoped memory for tpu_custom_call.1']
    #allocation5 [shape = 'u8[4096]{0}', space=vmem, size = 0x1000, scoped, tag = 'input window, operand 2']
    #allocation6 [shape = 's32[2]{0}', space=sflag, size = 0x8, scoped, tag = 'scoped memory for tpu_custom_call.1']
    #allocation7 [shape = 'u8[4096]{0}', space=vmem, size = 0x1000, scoped, tag = 'input window, operand 3, single buffered']
    #allocation8 [shape = 'u8[8192]{0}', space=vmem, size = 0x2000, scoped, tag = 'output window, operand 0']
    %10 = vsyncpa [#allocation3], 0
    %s11 = scalar_lea.sflag [#allocation3], 1
    %12 = vsyncpa %s11, 0
    %13 = vsyncpa [#allocation6], 0
    %s14 = scalar_lea.sflag [#allocation6], 1
    %15 = vsyncpa %s14, 0
    %16 = vsyncpa [#allocation4], 0
    %s17 = scalar_lea.sflag [#allocation4], 1
    %18 = vsyncpa %s17, 0
    loop: start=0, step=1, limit=6
    $region2: #{tpu_custom_call.1} parent=1 // loop_pre_header
      _
    $region3: #{tpu_custom_call.1} parent=1 // loop_header
      %s20 = sphi 0, %s24
      %p21 = scmp.ge.s32.totalorder %s20, 6
      %s27 = sphi 0, %s39
      %s28 = sphi 0, %s35
      %s29 = sphi 0, %s27
      %s30 = sphi 0, %s28
      %s31 = sphi 0, %s29
      %s32 = sphi 0, %s30
      %s44 = sphi 0, %s46
      %s47 = sphi 0, %s44
      %s48 = sphi 0, %s47
      %s64 = sphi 0, %s48
      %s78 = sphi 0, %s80
      %s81 = sphi 0, %s78
      %s82 = sphi 0, %s81
      %s98 = sphi 0, %s82
      %s112 = sphi 0, %s114
      %s115 = sphi 0, %s112
      %s116 = sphi 0, %s115
      %s132 = sphi 0, %s116
      %s136 = sphi 0, %s136
      %s138 = sphi 0, %s136
      %s139 = sphi 0, %s138
      %s153 = sphi 0, %s139
      %s157 = sphi 0, %s157
      %s159 = sphi 0, %s157
      %s160 = sphi 0, %s159
      %s174 = sphi 0, %s160
      %s182 = sphi 0, %s184
      %s185 = sphi 0, %s182
      %s186 = sphi 0, %s185
      %s202 = sphi 0, %s186
    $region4: #{tpu_custom_call.1} parent=1 // loop_header_branch
      %23 = sbr.rel (%p21) target = $region8
    $region5: #{tpu_custom_call.1} parent=1 // loop_body
      %s25 = ssub.s32 %s20, 1
      %s26 = ssub.s32 %s20, 2
      %s33 = sadd.s32 1, %s28
      %p34 = scmp.ge.s32.totalorder %s33, 2
      %s35 = scalar_select %p34, 0, %s33
      %s36 = sadd.s32 1, %s27
      %s37 = scalar_select %p34, %s36, %s27
      %p38 = scmp.ge.s32.totalorder %s37, 2
      %s39 = scalar_select %p38, 0, %s37
      %s40 = ssub.s32 %s27, %s39
      %s41 = ssub.s32 %s28, %s35
      %s42 = sor.u32 %s40, %s41
      %p43 = scmp.eq.s32.totalorder %s42, 0
      %s45 = sadd.s32 %s44, 1
      %s46 = scalar_select %p43, %s44, %s45
      %p49 = pneg %p43
      %p50 = scmp.eq.s32.totalorder %s20, 3
      %p51 = por %p49, %p50
      %p52 = scmp.ne.s32.totalorder %s44, %s47
      %p53 = scmp.eq.s32.totalorder %s20, 0
      %p54 = por %p52, %p53
      %p55 = scmp.ne.s32.totalorder %s44, %s47
      %p56 = scmp.eq.s32.totalorder %s25, 3
      %p57 = por %p55, %p56
      %p58 = scmp.ne.s32.totalorder %s47, %s48
      %p59 = scmp.eq.s32.totalorder %s25, 0
      %p60 = por %p58, %p59
      %p61 = scmp.ne.s32.totalorder %s47, %s48
      %p62 = scmp.eq.s32.totalorder %s26, 3
      %p63 = por %p61, %p62
      %p65 = scmp.ne.s32.totalorder %s48, %s64
      %p66 = scmp.eq.s32.totalorder %s26, 0
      %p67 = por %p65, %p66
      %s68 = ssub.s32 %s28, 1
      %p69 = scmp.gt.s32.totalorder %s68, 0
      %s70 = scalar_select %p69, %s68, 0
      %s71 = ssub.s32 %s35, 1
      %p72 = scmp.gt.s32.totalorder %s71, 0
      %s73 = scalar_select %p72, %s71, 0
      %s74 = ssub.s32 %s27, %s39
      %s75 = ssub.s32 %s70, %s73
      %s76 = sor.u32 %s74, %s75
      %p77 = scmp.eq.s32.totalorder %s76, 0
      %s79 = sadd.s32 %s78, 1
      %s80 = scalar_select %p77, %s78, %s79
      %p83 = pneg %p77
      %p84 = scmp.eq.s32.totalorder %s20, 3
      %p85 = por %p83, %p84
      %p86 = scmp.ne.s32.totalorder %s78, %s81
      %p87 = scmp.eq.s32.totalorder %s20, 0
      %p88 = por %p86, %p87
      %p89 = scmp.ne.s32.totalorder %s78, %s81
      %p90 = scmp.eq.s32.totalorder %s25, 3
      %p91 = por %p89, %p90
      %p92 = scmp.ne.s32.totalorder %s81, %s82
      %p93 = scmp.eq.s32.totalorder %s25, 0
      %p94 = por %p92, %p93
      %p95 = scmp.ne.s32.totalorder %s81, %s82
      %p96 = scmp.eq.s32.totalorder %s26, 3
      %p97 = por %p95, %p96
      %p99 = scmp.ne.s32.totalorder %s82, %s98
      %p100 = scmp.eq.s32.totalorder %s26, 0
      %p101 = por %p99, %p100
      %s102 = sadd.s32 %s28, 1
      %p103 = scmp.lt.s32.totalorder %s102, 1
      %s104 = scalar_select %p103, %s102, 1
      %s105 = sadd.s32 %s35, 1
      %p106 = scmp.lt.s32.totalorder %s105, 1
      %s107 = scalar_select %p106, %s105, 1
      %s108 = ssub.s32 %s27, %s39
      %s109 = ssub.s32 %s104, %s107
      %s110 = sor.u32 %s108, %s109
      %p111 = scmp.eq.s32.totalorder %s110, 0
      %s113 = sadd.s32 %s112, 1
      %s114 = scalar_select %p111, %s112, %s113
      %p117 = pneg %p111
      %p118 = scmp.eq.s32.totalorder %s20, 3
      %p119 = por %p117, %p118
      %p120 = scmp.ne.s32.totalorder %s112, %s115
      %p121 = scmp.eq.s32.totalorder %s20, 0
      %p122 = por %p120, %p121
      %p123 = scmp.ne.s32.totalorder %s112, %s115
      %p124 = scmp.eq.s32.totalorder %s25, 3
      %p125 = por %p123, %p124
      %p126 = scmp.ne.s32.totalorder %s115, %s116
      %p127 = scmp.eq.s32.totalorder %s25, 0
      %p128 = por %p126, %p127
      %p129 = scmp.ne.s32.totalorder %s115, %s116
      %p130 = scmp.eq.s32.totalorder %s26, 3
      %p131 = por %p129, %p130
      %p133 = scmp.ne.s32.totalorder %s116, %s132
      %p134 = scmp.eq.s32.totalorder %s26, 0
      %p135 = por %p133, %p134
      %s137 = sadd.s32 %s136, 1
      %p140 = scmp.eq.s32.totalorder %s20, 3
      %p141 = scmp.ne.s32.totalorder %s136, %s138
      %p142 = scmp.eq.s32.totalorder %s20, 0
      %p143 = por %p141, %p142
      %p144 = scmp.ne.s32.totalorder %s136, %s138
      %p145 = scmp.eq.s32.totalorder %s25, 3
      %p146 = por %p144, %p145
      %p147 = scmp.ne.s32.totalorder %s138, %s139
      %p148 = scmp.eq.s32.totalorder %s25, 0
      %p149 = por %p147, %p148
      %p150 = scmp.ne.s32.totalorder %s138, %s139
      %p151 = scmp.eq.s32.totalorder %s26, 3
      %p152 = por %p150, %p151
      %p154 = scmp.ne.s32.totalorder %s139, %s153
      %p155 = scmp.eq.s32.totalorder %s26, 0
      %p156 = por %p154, %p155
      %s158 = sadd.s32 %s157, 1
      %p161 = scmp.eq.s32.totalorder %s20, 3
      %p162 = scmp.ne.s32.totalorder %s157, %s159
      %p163 = scmp.eq.s32.totalorder %s20, 0
      %p164 = por %p162, %p163
      %p165 = scmp.ne.s32.totalorder %s157, %s159
      %p166 = scmp.eq.s32.totalorder %s25, 3
      %p167 = por %p165, %p166
      %p168 = scmp.ne.s32.totalorder %s159, %s160
      %p169 = scmp.eq.s32.totalorder %s25, 0
      %p170 = por %p168, %p169
      %p171 = scmp.ne.s32.totalorder %s159, %s160
      %p172 = scmp.eq.s32.totalorder %s26, 3
      %p173 = por %p171, %p172
      %p175 = scmp.ne.s32.totalorder %s160, %s174
      %p176 = scmp.eq.s32.totalorder %s26, 0
      %p177 = por %p175, %p176
      %s178 = ssub.s32 %s27, %s39
      %s179 = ssub.s32 %s28, %s35
      %s180 = sor.u32 %s178, %s179
      %p181 = scmp.eq.s32.totalorder %s180, 0
      %s183 = sadd.s32 %s182, 1
      %s184 = scalar_select %p181, %s182, %s183
      %p187 = pneg %p181
      %p188 = scmp.eq.s32.totalorder %s20, 3
      %p189 = por %p187, %p188
      %p190 = scmp.ne.s32.totalorder %s182, %s185
      %p191 = scmp.eq.s32.totalorder %s20, 0
      %p192 = por %p190, %p191
      %p193 = scmp.ne.s32.totalorder %s182, %s185
      %p194 = scmp.eq.s32.totalorder %s25, 3
      %p195 = por %p193, %p194
      %p196 = scmp.ne.s32.totalorder %s185, %s186
      %p197 = scmp.eq.s32.totalorder %s25, 0
      %p198 = por %p196, %p197
      %p199 = scmp.ne.s32.totalorder %s185, %s186
      %p200 = scmp.eq.s32.totalorder %s26, 3
      %p201 = por %p199, %p200
      %p203 = scmp.ne.s32.totalorder %s186, %s202
      %p204 = scmp.eq.s32.totalorder %s26, 0
      %p205 = por %p203, %p204
      %p206 = scmp.le.s32.totalorder 1, %s20
      %p207 = scmp.lt.s32.totalorder %s20, 5
      %p208 = pnand %p206, %p207
      %p209 = pneg %p208
      // Predicated region
      $region9: #{tpu_custom_call.1} parent=5 // pred_check
        _
      $region10: #{tpu_custom_call.1} parent=5 // pred_check_branch
        %211 = sbr.rel (%p208) target = $region12
      $region11: #{tpu_custom_call.1} parent=5 // pred_region
        %s212 = ssub.s32 %s20, 1
        // Predicated region
        $region13: #{tpu_custom_call.1} parent=11 // pred_check
          %p213 = pneg %p149
        $region14: #{tpu_custom_call.1} parent=11 // pred_check_branch
          %215 = sbr.rel (%p213) target = $region16
        $region15: #{tpu_custom_call.1} parent=11 // pred_region
          %217 = vsyncadd [#allocation6], 0
          %s218 = sshll.u32 %s3, 4
          %s219 = int_to_ptr.hbm [resolvable:$true] %s218
          %s220 = sshll.u32 [#allocation7], 4
          %s221 = int_to_ptr.vmem [resolvable:$true] %s220
          %226 = dma.hbm_to_vmem [thread:$0]  %s219, 128, %s221, [#allocation6], 64, 64, 4
        $region16: #{tpu_custom_call.1} parent=11 // pred_fallthru
          _
        // Predicated region
        $region17: #{tpu_custom_call.1} parent=11 // pred_check
          %p227 = pneg %p170
        $region18: #{tpu_custom_call.1} parent=11 // pred_check_branch
          %229 = sbr.rel (%p227) target = $region20
        $region19: #{tpu_custom_call.1} parent=11 // pred_region
          _
        $region20: #{tpu_custom_call.1} parent=11 // pred_fallthru
          _
      $region12: #{tpu_custom_call.1} parent=5 // pred_fallthru
        _
      %p230 = scmp.lt.s32.totalorder %s20, 4
      // Predicated region
      $region21: #{tpu_custom_call.1} parent=5 // pred_check
        %p231 = pneg %p230
      $region22: #{tpu_custom_call.1} parent=5 // pred_check_branch
        %233 = sbr.rel (%p231) target = $region24
      $region23: #{tpu_custom_call.1} parent=5 // pred_region
        // Predicated region
        $region25: #{tpu_custom_call.1} parent=23 // pred_check
          %p234 = pneg %p54
        $region26: #{tpu_custom_call.1} parent=23 // pred_check_branch
          %236 = sbr.rel (%p234) target = $region28
        $region27: #{tpu_custom_call.1} parent=23 // pred_region
          %p237 = scmp.lt.s32.totalorder %s27, 1
          %s238 = scalar_select %p237, %s27, 1
          %p239 = scmp.lt.s32.totalorder %s28, 1
          %s240 = scalar_select %p239, %s28, 1
          %s241 = smul.addr %s238, 2
          %s242 = sadd.s32 %s240, %s241
          %s243 = smul.addr %s242, 4
          %s244 = scalar_lea.vmem %s0, %s243
        $region28: #{tpu_custom_call.1} parent=23 // pred_fallthru
          _
        // Predicated region
        $region29: #{tpu_custom_call.1} parent=23 // pred_check
          %p245 = pneg %p88
        $region30: #{tpu_custom_call.1} parent=23 // pred_check_branch
          %247 = sbr.rel (%p245) target = $region32
        $region31: #{tpu_custom_call.1} parent=23 // pred_region
          %s248 = sand.u32 %s78, 1
          %s249 = scalar_lea.sflag [#allocation3], %s248
          %s250 = sand.u32 %s78, 1
          %s251 = smul.addr %s250, 4
          %s252 = scalar_lea.vmem [#allocation2], %s251
          %s253 = ssub.s32 %s28, 1
          %p254 = scmp.gt.s32.totalorder %s253, 0
          %s255 = scalar_select %p254, %s253, 0
          %257 = vsyncadd %s249, 0
          %s258 = smul.addr %s27, 2
          %s259 = sadd.s32 %s255, %s258
          %s260 = smul.addr %s259, 4
          %s261 = scalar_lea.hbm %s1, %s260
          %s263 = sshll.u32 %s261, 4
          %s264 = int_to_ptr.hbm [resolvable:$true] %s263
          %s265 = sshll.u32 %s252, 4
          %s266 = int_to_ptr.vmem [resolvable:$true] %s265
          %268 = dma.hbm_to_vmem [thread:$0]  %s264, 64, %s266, %s249
        $region32: #{tpu_custom_call.1} parent=23 // pred_fallthru
          _
        // Predicated region
        $region33: #{tpu_custom_call.1} parent=23 // pred_check
          %p269 = pneg %p122
        $region34: #{tpu_custom_call.1} parent=23 // pred_check_branch
          %271 = sbr.rel (%p269) target = $region36
        $region35: #{tpu_custom_call.1} parent=23 // pred_region
          %s272 = sand.u32 %s20, 1
          %s273 = scalar_lea.sflag [#allocation6], %s272
          %s274 = sand.u32 %s112, 1
          %s275 = smul.addr %s274, 4
          %s276 = scalar_lea.vmem [#allocation5], %s275
          %s277 = sadd.s32 %s28, 1
          %p278 = scmp.lt.s32.totalorder %s277, 1
          %s279 = scalar_select %p278, %s277, 1
          %281 = vsyncadd %s273, 0
          %s282 = smul.addr %s27, 2
          %s283 = sadd.s32 %s279, %s282
          %s284 = smul.addr %s283, 4
          %s285 = scalar_lea.hbm %s2, %s284
          %s287 = sshll.u32 %s285, 4
          %s288 = int_to_ptr.hbm [resolvable:$true] %s287
          %s289 = sshll.u32 %s276, 4
          %s290 = int_to_ptr.vmem [resolvable:$true] %s289
          %292 = dma.hbm_to_vmem [thread:$0]  %s288, 64, %s290, %s273
        $region36: #{tpu_custom_call.1} parent=23 // pred_fallthru
          _
      $region24: #{tpu_custom_call.1} parent=5 // pred_fallthru
        _
      %p293 = scmp.le.s32.totalorder 1, %s20
      %p294 = scmp.lt.s32.totalorder %s20, 5
      %p295 = pnand %p293, %p294
      %p296 = pneg %p295
      // Predicated region
      $region37: #{tpu_custom_call.1} parent=5 // pred_check
        _
      $region38: #{tpu_custom_call.1} parent=5 // pred_check_branch
        %298 = sbr.rel (%p295) target = $region40
      $region39: #{tpu_custom_call.1} parent=5 // pred_region
        %s299 = ssub.s32 %s20, 1
        %s300 = sand.u32 %s81, 1
        %s301 = scalar_lea.sflag [#allocation3], %s300
        %s302 = sand.u32 %s81, 1
        %s303 = smul.addr %s302, 4
        %s304 = scalar_lea.vmem [#allocation2], %s303
        // Predicated region
        $region41: #{tpu_custom_call.1} parent=39 // pred_check
          %p305 = pneg %p94
        $region42: #{tpu_custom_call.1} parent=39 // pred_check_branch
          %307 = sbr.rel (%p305) target = $region44
        $region43: #{tpu_custom_call.1} parent=39 // pred_region
          %309 = dma.done %s301, 64
        $region44: #{tpu_custom_call.1} parent=39 // pred_fallthru
          _
        %s310 = sand.u32 %s25, 1
        %s311 = scalar_lea.sflag [#allocation6], %s310
        %s312 = sand.u32 %s115, 1
        %s313 = smul.addr %s312, 4
        %s314 = scalar_lea.vmem [#allocation5], %s313
        // Predicated region
        $region45: #{tpu_custom_call.1} parent=39 // pred_check
          %p315 = pneg %p128
        $region46: #{tpu_custom_call.1} parent=39 // pred_check_branch
          %317 = sbr.rel (%p315) target = $region48
        $region47: #{tpu_custom_call.1} parent=39 // pred_region
          %319 = dma.done %s311, 64
        $region48: #{tpu_custom_call.1} parent=39 // pred_fallthru
          _
        // Predicated region
        $region49: #{tpu_custom_call.1} parent=39 // pred_check
          %p320 = pneg %p149
        $region50: #{tpu_custom_call.1} parent=39 // pred_check_branch
          %322 = sbr.rel (%p320) target = $region52
        $region51: #{tpu_custom_call.1} parent=39 // pred_region
          %324 = dma.done [#allocation6], 128
        $region52: #{tpu_custom_call.1} parent=39 // pred_fallthru
          _
        %p325 = scmp.lt.s32.totalorder %s29, 1
        %s326 = scalar_select %p325, %s29, 1
        %p327 = scmp.lt.s32.totalorder %s30, 1
        %s328 = scalar_select %p327, %s30, 1
        %s329 = smul.addr %s326, 2
        %s330 = sadd.s32 %s328, %s329
        %s331 = smul.addr %s330, 4
        %s332 = scalar_lea.vmem %s0, %s331
        %p333 = pneg %p60
        %p334 = pneg %p57
        %s335 = sand.u32 %s81, 1
        %s336 = scalar_lea.sflag [#allocation3], %s335
        %s337 = sand.u32 %s81, 1
        %s338 = smul.addr %s337, 4
        %s339 = scalar_lea.vmem [#allocation2], %s338
        %p340 = pneg %p94
        %p341 = pneg %p91
        %s342 = sand.u32 %s25, 1
        %s343 = scalar_lea.sflag [#allocation6], %s342
        %s344 = sand.u32 %s115, 1
        %s345 = smul.addr %s344, 4
        %s346 = scalar_lea.vmem [#allocation5], %s345
        %p347 = pneg %p128
        %p348 = pneg %p125
        %p349 = pneg %p149
        %p350 = pneg %p146
        %p351 = pneg %p170
        %p352 = pneg %p167
        %p353 = pneg %p198
        %p354 = pneg %p195
        %s355 = sand.u32 %s185, 1
        %s356 = scalar_lea.sflag [#allocation4], %s355
        %s357 = sand.u32 %s185, 1
        %s358 = smul.addr %s357, 8
        %s359 = scalar_lea.vmem [#allocation8], %s358
        %p360 = scmp.lt.s32.totalorder %s29, 1
        %s361 = scalar_select %p360, %s29, 1
        %p362 = scmp.lt.s32.totalorder %s30, 1
        %s363 = scalar_select %p362, %s30, 1
        %s364 = smul.addr %s361, 2
        %s365 = sadd.s32 %s363, %s364
        %s366 = smul.addr %s365, 4
        %s367 = scalar_lea.vmem %s0, %s366
        %s368 = ssub.s32 %s30, 1
        %p369 = scmp.gt.s32.totalorder %s368, 0
        %s370 = scalar_select %p369, %s368, 0
        %s371 = sadd.s32 %s30, 1
        %p372 = scmp.lt.s32.totalorder %s371, 1
        %s373 = scalar_select %p372, %s371, 1
        %p375 = scmp.eq.s32.totalorder %s30, 0
        %p376 = scmp.eq.s32.totalorder %s30, 1
        %v377 = vld [vmem:[%s304] sm:$0xf]
        %s378 = scalar_select %p375, 1, 0
        %v379 = vstv %s378
        %vm380 = vcmp.eq.s32.totalorder %v379, 1
        %v381 = vsel %vm380, 0, %v377
        %v382 = vld [vmem:[%s367] sm:$0xf]
        %v383 = vld [vmem:[%s314] sm:$0xf]
        %s384 = scalar_select %p376, 1, 0
        %v385 = vstv %s384
        %vm386 = vcmp.eq.s32.totalorder %v385, 1
        %v387 = vsel %vm386, 0, %v383
        %v389 = vunpack.c.l.b16 %v381
        %v390 = vpack.c.b16 %v389, %v389
        %391 = vrot.lane.b32.xlu0 %v390, 2
        %v392 = vpop.permute.xlu0 %391
        %v394 = vunpack.c.l.b16 %v382
        %v395 = vpack.c.b16 %v394, %v394
        %396 = vrot.lane.b32.xlu0 %v395, 2
        %v397 = vpop.permute.xlu0 %396
        %v399 = vunpack.c.l.b16 %v387
        %v400 = vpack.c.b16 %v399, %v399
        %401 = vrot.lane.b32.xlu0 %v400, 2
        %v402 = vpop.permute.xlu0 %401
        %vm403 = vcmask 15360
        %v406 = vsel %vm403, %v392, %v397
        %v408 = vsel %vm403, %v397, %v402
        %v409 = vld [vmem:[#allocation7] sm:$0xf]
        %v410 = vld [vmem:[#allocation7 + $0x4] sm:$0xf]
        %v413 = vunpack.c.l.b16 %v409
        %v414 = vunpack.c.l.b16 %v410
        %v415 = vpack.c.b16 %v414, %v413
        %416 = vrot.lane.b32.xlu0 %v415, 120
        %v417 = vpop.permute.xlu0 %416
        %420 = vrot.lane.b32.xlu0 %v406, 126
        %v421 = vpop.permute.xlu0 %420
        %422 = vrot.lane.b32.xlu0 %v408, 126
        %v423 = vpop.permute.xlu0 %422
        %vm424 = vcmask 1031168
        %v425 = vsel %vm424, %v421, %v423
        %vm426 = vcmask 64512
        %v428 = vsel %vm426, %v417, 0
        %vm430 = vcmask 1043456
        %v432 = vsel %vm430, %v425, 0
        %434 = vmatpush.bf16.msra.mxu0 0
        %435 = vmatpush.bf16.msra.mxu0 0
        %436 = vmatpush.bf16.msra.mxu0 0
        %437 = vmatpush.bf16.msra.mxu0 0
        %438 = vmatpush.bf16.msra.mxu0 0
        %439 = vmatpush.bf16.msra.mxu0 0
        %440 = vmatpush.bf16.msra.mxu0 0
        %441 = vmatpush.bf16.msra.mxu0 %v432
        %442 = vmatmul.bf16.gmra.mxu0 %v428
        %v443 = vpop.f32.mrf.mxu0
        %v444 = vadd.f32 0.0, %v443
        %v445 = vpop.f32.mrf.mxu0
        %v446 = vadd.f32 0.0, %v445
        %447 = vdwg.mxu0
        %v449 = vsel %vm426, %v415, 0
        %v451 = vsel %vm430, %v406, 0
        %453 = vmatpush.bf16.msra.mxu0 0
        %454 = vmatpush.bf16.msra.mxu0 0
        %455 = vmatpush.bf16.msra.mxu0 0
        %456 = vmatpush.bf16.msra.mxu0 0
        %457 = vmatpush.bf16.msra.mxu0 0
        %458 = vmatpush.bf16.msra.mxu0 0
        %459 = vmatpush.bf16.msra.mxu0 0
        %460 = vmatpush.bf16.msra.mxu0 %v451
        %461 = vmatmul.bf16.gmra.mxu0 %v449
        %v462 = vpop.f32.mrf.mxu0
        %v463 = vadd.f32 %v444, %v462
        %v464 = vpop.f32.mrf.mxu0
        %v465 = vadd.f32 %v446, %v464
        %466 = vdwg.mxu0
        %467 = vrot.lane.b32.xlu0 %v415, 112
        %v468 = vpop.permute.xlu0 %467
        %469 = vrot.lane.b32.xlu0 %v406, 124
        %v470 = vpop.permute.xlu0 %469
        %471 = vrot.lane.b32.xlu0 %v408, 124
        %v472 = vpop.permute.xlu0 %471
        %vm473 = vcmask 1014784
        %v474 = vsel %vm473, %v470, %v472
        %v476 = vsel %vm426, %v468, 0
        %v479 = vsel %vm430, %v474, 0
        %481 = vmatpush.bf16.msra.mxu0 0
        %482 = vmatpush.bf16.msra.mxu0 0
        %483 = vmatpush.bf16.msra.mxu0 0
        %484 = vmatpush.bf16.msra.mxu0 0
        %485 = vmatpush.bf16.msra.mxu0 0
        %486 = vmatpush.bf16.msra.mxu0 0
        %487 = vmatpush.bf16.msra.mxu0 0
        %488 = vmatpush.bf16.msra.mxu0 %v479
        %489 = vmatmul.bf16.gmra.mxu0 %v476
        %v490 = vpop.f32.mrf.mxu0
        %v491 = vadd.f32 0.0, %v490
        %v492 = vpop.f32.mrf.mxu0
        %v493 = vadd.f32 0.0, %v492
        %494 = vdwg.mxu0
        %v495 = vadd.f32 %v463, %v491
        %v496 = vadd.f32 %v465, %v493
        %v497 = vld [vmem:[%s4] sm:$0xff]
        %v498 = vld [vmem:[%s4 + $0x8] sm:$0xff]
        %500 = vset.pattern.permute.xlu0 0
        %501 = vperm.xlu0 %500, %v497
        %v502 = vpop.permute.xlu0 %501
        %505 = vset.pattern.permute.xlu0 0
        %506 = vperm.xlu0 %505, %v498
        %v507 = vpop.permute.xlu0 %506
        %v509 = vadd.f32 %v495, %v502
        %v510 = vadd.f32 %v496, %v507
        %s511 = smul.u32 %s30, 128
        %v512 = vlaneseq
        %v513 = vand.u32 %v512, 127
        %v514 = vstv %s511
        %v515 = vadd.s32 %v514, %v513
        %vm516 = vcmp.lt.s32.totalorder %v515, 40
        %v517 = vsel %vm516, %v509, 0.0
        %v518 = vsel %vm516, %v510, 0.0
        %v519 = vpack.c.bf16 %v517, %v517
        %v520 = vpack.c.bf16 %v518, %v518
        %521 = vst [vmem:[%s359] sm:$0xf] %v519
        %522 = vst [vmem:[%s359 + $0x4] sm:$0xf] %v520
        %s523 = sand.u32 %s185, 1
        %s524 = scalar_lea.sflag [#allocation4], %s523
        %s525 = sand.u32 %s185, 1
        %s526 = smul.addr %s525, 8
        %s527 = scalar_lea.vmem [#allocation8], %s526
        // Predicated region
        $region53: #{tpu_custom_call.1} parent=39 // pred_check
          %p528 = pneg %p195
        $region54: #{tpu_custom_call.1} parent=39 // pred_check_branch
          %530 = sbr.rel (%p528) target = $region56
        $region55: #{tpu_custom_call.1} parent=39 // pred_region
          %532 = vsyncadd %s524, 0
          %s533 = smul.addr %s29, 4
          %s534 = sadd.s32 %s30, %s533
          %s535 = smul.addr %s534, 4
          %s536 = scalar_lea.hbm %s5, %s535
          %s537 = sshll.u32 %s527, 4
          %s538 = int_to_ptr.vmem [resolvable:$true] %s537
          %s539 = sshll.u32 %s536, 4
          %s540 = int_to_ptr.hbm [resolvable:$true] %s539
          %545 = dma.vmem_to_hbm [thread:$0]  %s538, 128, %s540, %s524, 64, 128, 4
        $region56: #{tpu_custom_call.1} parent=39 // pred_fallthru
          _
      $region40: #{tpu_custom_call.1} parent=5 // pred_fallthru
        _
      %p546 = scmp.le.s32.totalorder 2, %s20
      // Predicated region
      $region57: #{tpu_custom_call.1} parent=5 // pred_check
        %p547 = pneg %p546
      $region58: #{tpu_custom_call.1} parent=5 // pred_check_branch
        %549 = sbr.rel (%p547) target = $region60
      $region59: #{tpu_custom_call.1} parent=5 // pred_region
        %s550 = ssub.s32 %s20, 2
        // Predicated region
        $region61: #{tpu_custom_call.1} parent=59 // pred_check
          %p551 = pneg %p201
        $region62: #{tpu_custom_call.1} parent=59 // pred_check_branch
          %553 = sbr.rel (%p551) target = $region64
        $region63: #{tpu_custom_call.1} parent=59 // pred_region
          %s554 = sand.u32 %s186, 1
          %s555 = scalar_lea.sflag [#allocation4], %s554
          %s556 = sand.u32 %s186, 1
          %s557 = smul.addr %s556, 8
          %s558 = scalar_lea.vmem [#allocation8], %s557
          %560 = dma.done %s555, 128
        $region64: #{tpu_custom_call.1} parent=59 // pred_fallthru
          _
      $region60: #{tpu_custom_call.1} parent=5 // pred_fallthru
        _
    $region6: #{tpu_custom_call.1} parent=1 // loop_footer
      %s24 = sadd.s32 1, %s20
    $region7: #{tpu_custom_call.1} parent=1 // loop_footer_branch
      %19 = sbr.rel target = $region3
    $region8: #{tpu_custom_call.1} parent=1 // loop_exit
      _
    %561 = vsyncpa [#allocation3], 1
    %s562 = scalar_lea.sflag [#allocation3], 1
    %563 = vsyncpa %s562, 1
    %564 = vsyncpa [#allocation6], 1
    %s565 = scalar_lea.sflag [#allocation6], 1
    %566 = vsyncpa %s565, 1
    %567 = vsyncpa [#allocation4], 1
    %s568 = scalar_lea.sflag [#allocation4], 1
    %569 = vsyncpa %s568, 1

</llo_original>
